<compile_context>
chip_gen: v7x
topology: tpu7x:2x2x1
jax: 0.10.0
libtpu: 0.0.40
codegen_flags: <defaults>
</compile_context>

<pallas_src>
import jax
import jax.numpy as jnp
from jax import lax
from jax.experimental import pallas as pl
from jax.experimental.pallas import tpu as pltpu

EPS = 1e-5  # nn.InstanceNorm1d default eps


# ---------------------------------------------------------------------------
# VMEM budgeting
# ---------------------------------------------------------------------------
def _vmem_capacity_bytes():
    """Physical per-core VMEM, queried from the chip (conservative fallback)."""
    try:
        info = pltpu.get_tpu_info()
        cap = getattr(info, "vmem_capacity_bytes", None)
        if cap:
            return int(cap)
    except Exception:
        pass
    return 64 * 1024 * 1024  # v7x physical size = safest assumption


def _default_budget(cap):
    # ~80 MiB on 128 MiB parts (v5e / v6e), ~40 MiB on 64 MiB parts (v7x):
    # leaves room for the compiler's internal scratch and transient temps.
    return min(cap * 5 // 8, 80 * 1024 * 1024)


def _vmem_limit(cap):
    # Raise the scoped VMEM limit well above the 16/32 MiB defaults while
    # keeping headroom under the physical capacity.
    return min(cap * 7 // 8, 120 * 1024 * 1024)


def _choose_block_d(S, D, itemsize, budget):
    """Largest lane-dense channel tile TD dividing D that fits `budget`.

    Footprint model per grid step: double-buffered x1 / x2 / out slabs of
    (S, TD) in the input dtype plus ~one fp32 temp slab  -> 6*itemsize + 4
    bytes per element.  Returns None if even the minimal tile busts the
    budget (caller falls back to the S-tiled two-pass path).
    """
    per_elem = 6 * itemsize + 4
    max_elems = max(budget // per_elem, 1)
    cap_td = max_elems // max(S, 1)
    if D % 128 != 0:
        # TODO(synk): D not lane-aligned -> full-D block (masked vst at <100%
        # lane utilization). A channels-first layout upstream would make this
        # lane-dense; not worth an extra HBM transpose pass here.
        return D if D <= cap_td else None
    if cap_td < 128:
        return None
    nd = D // 128
    best = 128
    for k in range(1, nd + 1):
        if nd % k == 0 and 128 * k <= cap_td:
            best = 128 * k
    return best


def _choose_blocks_two_pass(S, D, itemsize, budget):
    """(TD, TS) for the S-tiled two-pass path."""
    per_elem = 6 * itemsize + 4
    max_elems = max(budget // per_elem, 1)
    if D % 128 == 0:
        nd = D // 128
        td = 128
        for k in range(1, nd + 1):
            # Prefer the widest lane tile that still allows a reasonably tall
            # S tile (long contiguous DMA rows, few grid steps).
            if nd % k == 0 and (max_elems // (128 * k)) >= 512:
                td = 128 * k
    else:
        td = D  # TODO(synk): tiny / odd D -> masked stores, see note above.
    ts = max(8, (max_elems // td) // 8 * 8)
    ts = min(ts, S)
    return td, ts


# ---------------------------------------------------------------------------
# Fast path: fused single-pass kernel (full S resident per (batch, D-tile))
# ---------------------------------------------------------------------------
def _add_instnorm_fused_kernel(x1_ref, x2_ref, gamma_ref, beta_ref, o_ref):
    # Phase 1: statistics.  Cast each operand to f32 *before* the add so bf16
    # inputs do not lose bits in the residual add, and center on a per-channel
    # pivot (row 0) to tame E[x^2]-E[x]^2 cancellation.
    x = x1_ref[...].astype(jnp.float32) + x2_ref[...].astype(jnp.float32)  # (S, TD)
    inv_n = 1.0 / x.shape[0]
    pivot = x[0:1, :]
    xc = x - pivot
    mean_c = jnp.sum(xc, axis=0, keepdims=True) * inv_n
    var = jnp.sum(xc * xc, axis=0, keepdims=True) * inv_n - mean_c * mean_c
    mean = mean_c + pivot
    inv_std = lax.rsqrt(jnp.maximum(var, 0.0) + EPS)
    scale = inv_std * gamma_ref[...]            # fold gamma into inv_std
    shift = beta_ref[...] - mean * scale
    # Phase 2: recompute the sum from the still-resident VMEM inputs instead
    # of keeping the fp32 temp live across both phases (saves ~1 slab of
    # VMEM and one vst+vld per vreg; the extra VALU add is free under HBM
    # slack).
    y = x1_ref[...].astype(jnp.float32) + x2_ref[...].astype(jnp.float32)
    o_ref[...] = (y * scale + shift).astype(o_ref.dtype)


def _single_pass(x1, x2, gamma2d, beta2d, TD, vmem_limit):
    B, S, D = x1.shape
    itemsize = jnp.dtype(x1.dtype).itemsize
    n_d = D // TD
    # Megacore (v7x has 2 TensorCores): guarantee >= 2 parallel grid steps so
    # both cores stream HBM.  Harmless (~0.35us extra step) on 1-TC chips.
    if B * n_d < 2 and D % 256 == 0:
        TD = D // 2            # still a 128-multiple divisor of D
        n_d = D // TD
    # TODO(synk): B==1 with D not a multiple of 256 stays a 1-step grid.

    x_spec = pl.BlockSpec((None, S, TD), lambda b, d: (b, 0, d))
    p_spec = pl.BlockSpec((1, TD), lambda b, d: (0, d))

    return pl.pallas_call(
        _add_instnorm_fused_kernel,
        out_shape=jax.ShapeDtypeStruct((B, S, D), x1.dtype),
        grid_spec=pltpu.PrefetchScalarGridSpec(
            num_scalar_prefetch=0,
            grid=(B, n_d),
            in_specs=[x_spec, x_spec, p_spec, p_spec],
            out_specs=pl.BlockSpec((None, S, TD), lambda b, d: (b, 0, d)),
        ),
        compiler_params=pltpu.CompilerParams(
            dimension_semantics=("parallel", "parallel"),
            vmem_limit_bytes=int(vmem_limit),
        ),
        cost_estimate=pl.CostEstimate(
            flops=8 * B * S * D,
            transcendentals=B * D,
            bytes_accessed=3 * B * S * D * itemsize + 2 * D * 4,
        ),
    )(x1, x2, gamma2d, beta2d)


# ---------------------------------------------------------------------------
# Large-S path: two passes with S tiled on the grid
# ---------------------------------------------------------------------------
def _two_pass(x1, x2, gamma2d, beta2d, budget, vmem_limit):
    B, S, D = x1.shape
    itemsize = jnp.dtype(x1.dtype).itemsize
    td, ts = _choose_blocks_two_pass(S, D, itemsize, budget)
    n_d = D // td
    n_s = pl.cdiv(S, ts)
    inv_n = 1.0 / S

    x_spec = pl.BlockSpec((None, ts, td), lambda b, d, s: (b, s, d))
    stats_spec = pl.BlockSpec((None, 2, td), lambda b, d, s: (b, 0, d))
    p_spec = pl.BlockSpec((1, td), lambda b, d, s: (0, d))

    # Pass 1: per-(batch, channel) sum / sum-of-squares accumulated over S
    # tiles into VMEM scratch, written out at the last S step.
    # TODO(synk): plain sum/sumsq accumulation (no pivot) is less robust to
    # cancellation than the fused path; acceptable in f32 for activations.
    def stats_kernel(x1_ref, x2_ref, stats_ref, s1_sc, s2_sc):
        s = pl.program_id(2)

        @pl.when(s == 0)
        def _():
            s1_sc[...] = jnp.zeros_like(s1_sc)
            s2_sc[...] = jnp.zeros_like(s2_sc)

        x = x1_ref[...].astype(jnp.float32) + x2_ref[...].astype(jnp.float32)
        # Mask rows past the true sequence length (tail block of a cdiv grid).
        row = lax.broadcasted_iota(jnp.int32, x.shape, 0) + s * x.shape[0]
        x = jnp.where(row < S, x, 0.0)
        s1_sc[...] += jnp.sum(x, axis=0, keepdims=True)
        s2_sc[...] += jnp.sum(x * x, axis=0, keepdims=True)

        @pl.when(s == pl.num_programs(2) - 1)
        def _():
            stats_ref[0:1, :] = s1_sc[...]
            stats_ref[1:2, :] = s2_sc[...]

    stats = pl.pallas_call(
        stats_kernel,
        out_shape=jax.ShapeDtypeStruct((B, 2, D), jnp.float32),
        grid_spec=pltpu.PrefetchScalarGridSpec(
            num_scalar_prefetch=0,
            grid=(B, n_d, n_s),
            in_specs=[x_spec, x_spec],
            out_specs=stats_spec,
            scratch_shapes=[
                pltpu.VMEM((1, td), jnp.float32),
                pltpu.VMEM((1, td), jnp.float32),
            ],
        ),
        compiler_params=pltpu.CompilerParams(
            dimension_semantics=("parallel", "parallel", "arbitrary"),
            vmem_limit_bytes=int(vmem_limit),
        ),
        cost_estimate=pl.CostEstimate(
            flops=4 * B * S * D,
            transcendentals=0,
            bytes_accessed=2 * B * S * D * itemsize + B * 2 * D * 4,
        ),
    )(x1, x2)

    # Pass 2: re-stream the S tiles and apply the folded scale/shift.
    def apply_kernel(x1_ref, x2_ref, stats_ref, gamma_ref, beta_ref, o_ref):
        x = x1_ref[...].astype(jnp.float32) + x2_ref[...].astype(jnp.float32)
        mean = stats_ref[0:1, :] * inv_n
        var = stats_ref[1:2, :] * inv_n - mean * mean
        inv_std = lax.rsqrt(jnp.maximum(var, 0.0) + EPS)
        scale = inv_std * gamma_ref[...]
        shift = beta_ref[...] - mean * scale
        o_ref[...] = (x * scale + shift).astype(o_ref.dtype)

    return pl.pallas_call(
        apply_kernel,
        out_shape=jax.ShapeDtypeStruct((B, S, D), x1.dtype),
        grid_spec=pltpu.PrefetchScalarGridSpec(
            num_scalar_prefetch=0,
            grid=(B, n_d, n_s),
            in_specs=[x_spec, x_spec, stats_spec, p_spec, p_spec],
            out_specs=x_spec,
        ),
        compiler_params=pltpu.CompilerParams(
            dimension_semantics=("parallel", "parallel", "parallel"),
            vmem_limit_bytes=int(vmem_limit),
        ),
        cost_estimate=pl.CostEstimate(
            flops=5 * B * S * D,
            transcendentals=B * D,
            bytes_accessed=3 * B * S * D * itemsize + B * 2 * D * 4 + 2 * D * 4,
        ),
    )(x1, x2, stats, gamma2d, beta2d)


# ---------------------------------------------------------------------------
# Public wrapper
# ---------------------------------------------------------------------------
def add_and_instance_norm(x1, x2, gamma, beta, *, vmem_budget_bytes=None):
    """x1, x2: (B, S, D). gamma, beta: (D,). Returns (B, S, D)."""
    assert x1.shape == x2.shape and x1.ndim == 3
    B, S, D = x1.shape
    itemsize = jnp.dtype(x1.dtype).itemsize

    cap = _vmem_capacity_bytes()
    budget = vmem_budget_bytes if vmem_budget_bytes is not None else _default_budget(cap)
    vmem_limit = _vmem_limit(cap)

    gamma2d = gamma.reshape(1, D).astype(jnp.float32)
    beta2d = beta.reshape(1, D).astype(jnp.float32)

    td = _choose_block_d(S, D, itemsize, budget)
    if td is not None:
        return _single_pass(x1, x2, gamma2d, beta2d, td, vmem_limit)
    return _two_pass(x1, x2, gamma2d, beta2d, budget, vmem_limit)


def _reference(x1, x2, gamma, beta):
    x = x1.astype(jnp.float32) + x2.astype(jnp.float32)
    mean = jnp.mean(x, axis=1, keepdims=True)
    var = jnp.mean((x - mean) ** 2, axis=1, keepdims=True)
    y = (x - mean) / jnp.sqrt(var + EPS)
    return (y * gamma[None, None, :] + beta[None, None, :]).astype(x1.dtype)


if __name__ == "__main__":
    key = jax.random.PRNGKey(0)
    k1, k2, k3, k4, k5, k6 = jax.random.split(key, 6)

    def run_and_check(x1, x2, gamma, beta, **kw):
        out = jax.block_until_ready(add_and_instance_norm(x1, x2, gamma, beta, **kw))
        ref = _reference(x1, x2, gamma, beta)
        assert out.shape == x1.shape
        assert jnp.allclose(out, ref, atol=1e-4, rtol=1e-4)

    def affine(D):
        g = jnp.ones((D,), jnp.float32) + 0.01 * jnp.arange(D, dtype=jnp.float32)
        b = 0.001 * jnp.arange(D, dtype=jnp.float32)
        return g, b

    # 1) Module-spec shapes (embedding_dim=32): full-D block, fused single pass.
    B, S, D = 2, 8, 32
    g, b = affine(D)
    run_and_check(jax.random.normal(k1, (B, S, D), jnp.float32),
                  jax.random.normal(k2, (B, S, D), jnp.float32), g, b)

    # 2) Lane-dense D tiling + megacore split (B==1 -> D split so the grid has
    #    two parallel steps and both v7x TensorCores get work).
    B, S, D = 1, 16, 256
    g, b = affine(D)
    run_and_check(jax.random.normal(k3, (B, S, D), jnp.float32),
                  jax.random.normal(k4, (B, S, D), jnp.float32), g, b)

    # 3) Large-S two-pass path, forced with a tiny budget so it is exercised
    #    at small shapes (the real trigger is S large enough to bust VMEM).
    B, S, D = 2, 64, 256
    g, b = affine(D)
    run_and_check(jax.random.normal(k5, (B, S, D), jnp.float32),
                  jax.random.normal(k6, (B, S, D), jnp.float32), g, b,
                  vmem_budget_bytes=64 * 1024)

    print("KERNEL_OK")
</pallas_src>

<mosaic_0001>
module attributes {stable_mosaic.version = 11 : i64} {
  func.func @_add_instnorm_fused_kernel(%arg0: i32, %arg1: i32, %arg2: memref<1x8x32xf32, #tpu.memory_space<vmem>>, %arg3: memref<1x8x32xf32, #tpu.memory_space<vmem>>, %arg4: memref<1x32xf32, #tpu.memory_space<vmem>>, %arg5: memref<1x32xf32, #tpu.memory_space<vmem>>, %arg6: memref<1x8x32xf32, #tpu.memory_space<vmem>>) attributes {dimension_semantics = [#tpu.dimension_semantics<parallel>, #tpu.dimension_semantics<parallel>], iteration_bounds = array<i64: 2, 1>, scalar_prefetch = 0 : i64, scratch_operands = 0 : i64, tpu.core_type = #tpu.core_type<tc>, window_params = [{transform_indices = @transform_0, window_bounds = array<i64: 1, 8, 32>}, {transform_indices = @transform_1, window_bounds = array<i64: 1, 8, 32>}, {transform_indices = @transform_2, window_bounds = array<i64: 1, 32>}, {transform_indices = @transform_3, window_bounds = array<i64: 1, 32>}, {transform_indices = @transform_4, window_bounds = array<i64: 1, 8, 32>}]} {
    %c0 = arith.constant 0 : index
    %c0_0 = arith.constant 0 : index
    %c0_1 = arith.constant 0 : index
    %0 = vector.load %arg2[%c0, %c0_0, %c0_1] : memref<1x8x32xf32, #tpu.memory_space<vmem>>, vector<1x8x32xf32>
    %1 = vector.shape_cast %0 : vector<1x8x32xf32> to vector<8x32xf32>
    %c0_2 = arith.constant 0 : index
    %c0_3 = arith.constant 0 : index
    %c0_4 = arith.constant 0 : index
    %2 = vector.load %arg3[%c0_2, %c0_3, %c0_4] : memref<1x8x32xf32, #tpu.memory_space<vmem>>, vector<1x8x32xf32>
    %3 = vector.shape_cast %2 : vector<1x8x32xf32> to vector<8x32xf32>
    %4 = arith.addf %1, %3 : vector<8x32xf32>
    %5 = vector.extract_strided_slice %4 {offsets = [0, 0], sizes = [1, 32], strides = [1, 1]} : vector<8x32xf32> to vector<1x32xf32>
    %6 = vector.broadcast %5 : vector<1x32xf32> to vector<8x32xf32>
    %7 = arith.subf %4, %6 : vector<8x32xf32>
    %cst = arith.constant dense<0.000000e+00> : vector<32xf32>
    %8 = vector.multi_reduction <add>, %7, %cst [0] : vector<8x32xf32> to vector<32xf32>
    %9 = vector.shape_cast %8 : vector<32xf32> to vector<1x32xf32>
    %cst_5 = arith.constant 1.250000e-01 : f32
    %10 = vector.broadcast %cst_5 : f32 to vector<1x32xf32>
    %11 = arith.mulf %9, %10 : vector<1x32xf32>
    %12 = arith.mulf %7, %7 : vector<8x32xf32>
    %cst_6 = arith.constant dense<0.000000e+00> : vector<32xf32>
    %13 = vector.multi_reduction <add>, %12, %cst_6 [0] : vector<8x32xf32> to vector<32xf32>
    %14 = vector.shape_cast %13 : vector<32xf32> to vector<1x32xf32>
    %cst_7 = arith.constant 1.250000e-01 : f32
    %15 = vector.broadcast %cst_7 : f32 to vector<1x32xf32>
    %16 = arith.mulf %14, %15 : vector<1x32xf32>
    %17 = arith.mulf %11, %11 : vector<1x32xf32>
    %18 = arith.subf %16, %17 : vector<1x32xf32>
    %19 = arith.addf %11, %5 : vector<1x32xf32>
    %cst_8 = arith.constant 0.000000e+00 : f32
    %20 = vector.broadcast %cst_8 : f32 to vector<1x32xf32>
    %21 = arith.maximumf %18, %20 : vector<1x32xf32>
    %cst_9 = arith.constant 9.99999974E-6 : f32
    %22 = vector.broadcast %cst_9 : f32 to vector<1x32xf32>
    %23 = arith.addf %21, %22 : vector<1x32xf32>
    %24 = math.rsqrt %23 : vector<1x32xf32>
    %c0_10 = arith.constant 0 : index
    %c0_11 = arith.constant 0 : index
    %25 = vector.load %arg4[%c0_10, %c0_11] : memref<1x32xf32, #tpu.memory_space<vmem>>, vector<1x32xf32>
    %26 = arith.mulf %24, %25 : vector<1x32xf32>
    %c0_12 = arith.constant 0 : index
    %c0_13 = arith.constant 0 : index
    %27 = vector.load %arg5[%c0_12, %c0_13] : memref<1x32xf32, #tpu.memory_space<vmem>>, vector<1x32xf32>
    %28 = arith.mulf %19, %26 : vector<1x32xf32>
    %29 = arith.subf %27, %28 : vector<1x32xf32>
    %c0_14 = arith.constant 0 : index
    %c0_15 = arith.constant 0 : index
    %c0_16 = arith.constant 0 : index
    %30 = vector.load %arg2[%c0_14, %c0_15, %c0_16] : memref<1x8x32xf32, #tpu.memory_space<vmem>>, vector<1x8x32xf32>
    %31 = vector.shape_cast %30 : vector<1x8x32xf32> to vector<8x32xf32>
    %c0_17 = arith.constant 0 : index
    %c0_18 = arith.constant 0 : index
    %c0_19 = arith.constant 0 : index
    %32 = vector.load %arg3[%c0_17, %c0_18, %c0_19] : memref<1x8x32xf32, #tpu.memory_space<vmem>>, vector<1x8x32xf32>
    %33 = vector.shape_cast %32 : vector<1x8x32xf32> to vector<8x32xf32>
    %34 = arith.addf %31, %33 : vector<8x32xf32>
    %35 = vector.broadcast %26 : vector<1x32xf32> to vector<8x32xf32>
    %36 = arith.mulf %34, %35 : vector<8x32xf32>
    %37 = vector.broadcast %29 : vector<1x32xf32> to vector<8x32xf32>
    %38 = arith.addf %36, %37 : vector<8x32xf32>
    %c0_20 = arith.constant 0 : index
    %c0_21 = arith.constant 0 : index
    %c0_22 = arith.constant 0 : index
    %39 = vector.load %arg6[%c0_20, %c0_21, %c0_22] : memref<1x8x32xf32, #tpu.memory_space<vmem>>, vector<1x8x32xf32>
    %40 = vector.shape_cast %39 : vector<1x8x32xf32> to vector<8x32xf32>
    %41 = vector.shape_cast %38 : vector<8x32xf32> to vector<1x8x32xf32>
    tpu.vector_store %arg6[%c0_20, %c0_21, %c0_22], %41 {strides = array<i32>} : memref<1x8x32xf32, #tpu.memory_space<vmem>>, vector<1x8x32xf32>,
    return
  }
  func.func @transform_0(%arg0: i32, %arg1: i32) -> (i32, i32, i32) {
    %c0_i32 = arith.constant 0 : i32
    %c0_i32_0 = arith.constant 0 : i32
    return %arg0, %c0_i32, %arg1 : i32, i32, i32
  }
  func.func @transform_1(%arg0: i32, %arg1: i32) -> (i32, i32, i32) {
    %c0_i32 = arith.constant 0 : i32
    %c0_i32_0 = arith.constant 0 : i32
    return %arg0, %c0_i32, %arg1 : i32, i32, i32
  }
  func.func @transform_2(%arg0: i32, %arg1: i32) -> (i32, i32) {
    %c0_i32 = arith.constant 0 : i32
    %c0_i32_0 = arith.constant 0 : i32
    return %c0_i32, %arg1 : i32, i32
  }
  func.func @transform_3(%arg0: i32, %arg1: i32) -> (i32, i32) {
    %c0_i32 = arith.constant 0 : i32
    %c0_i32_0 = arith.constant 0 : i32
    return %c0_i32, %arg1 : i32, i32
  }
  func.func @transform_4(%arg0: i32, %arg1: i32) -> (i32, i32, i32) {
    %c0_i32 = arith.constant 0 : i32
    %c0_i32_0 = arith.constant 0 : i32
    return %arg0, %c0_i32, %arg1 : i32, i32, i32
  }
}

</mosaic_0001>

<llo_original>
// kernel: tpu_custom_call.1
$region0: #{tpu_custom_call.1}
  #allocation0 [shape = 'u32[]', space=smem, size = 0x4, offset = 0x4, fixed_abs, tag = 'smem constant byte address 0x4 - core index']
  #allocation1 [shape = 'u32[144,128]{1,0:T(1,128)}', space=vmem, size = 0x12000, scoped, tag = 'internal scratch']
  %s0 = inlined_call_operand.hbm [shape: f32[2,8,32], index: 0, kind: input, shape index: {}]
  %s1 = inlined_call_operand.hbm [shape: f32[2,8,32], index: 1, kind: input, shape index: {}]
  %s2 = inlined_call_operand.vmem [shape: f32[1,32], index: 2, kind: input, shape index: {}]
  %s3 = inlined_call_operand.vmem [shape: f32[1,32], index: 3, kind: input, shape index: {}]
  %s4 = inlined_call_operand.hbm [shape: f32[2,8,32], index: 4, kind: output, shape index: {}]
  %s5 = sld [smem:[#allocation0]]
  $region57: #{tpu_custom_call.1} parent=0
    _
  %s7 = ssub.s32 1, %s5
  %s8 = scalar_select 0, %s7, %s5
  $region1: #{tpu_custom_call.1} parent=0
    #allocation2 [shape = 'u8[8192]{0}', space=vmem, size = 0x2000, scoped, tag = 'input window, operand 0']
    #allocation3 [shape = 's32[2]{0}', space=sflag, size = 0x8, scoped, tag = 'scoped memory for tpu_custom_call.1']
    #allocation4 [shape = 's32[2]{0}', space=sflag, size = 0x8, scoped, tag = 'scoped memory for tpu_custom_call.1']
    #allocation5 [shape = 'u8[8192]{0}', space=vmem, size = 0x2000, scoped, tag = 'input window, operand 1']
    #allocation6 [shape = 's32[2]{0}', space=sflag, size = 0x8, scoped, tag = 'scoped memory for tpu_custom_call.1']
    #allocation7 [shape = 'u8[8192]{0}', space=vmem, size = 0x2000, scoped, tag = 'output window, operand 0']
    %9 = vsyncpa [#allocation3], 0
    %s10 = scalar_lea.sflag [#allocation3], 1
    %11 = vsyncpa %s10, 0
    %12 = vsyncpa [#allocation6], 0
    %s13 = scalar_lea.sflag [#allocation6], 1
    %14 = vsyncpa %s13, 0
    %15 = vsyncpa [#allocation4], 0
    %s16 = scalar_lea.sflag [#allocation4], 1
    %17 = vsyncpa %s16, 0
    loop: start=0, step=1, limit=4
    $region2: #{tpu_custom_call.1} parent=1 // loop_pre_header
      _
    $region3: #{tpu_custom_call.1} parent=1 // loop_header
      %s19 = sphi 0, %s23
      %p20 = scmp.ge.s32.totalorder %s19, 4
      %s26 = sphi 0, %s38
      %s27 = sphi 0, %s34
      %s28 = sphi 0, %s26
      %s29 = sphi 0, %s27
      %s30 = sphi 0, %s28
      %s31 = sphi 0, %s29
      %s43 = sphi 0, %s45
      %s46 = sphi 0, %s43
      %s47 = sphi 0, %s46
      %s63 = sphi 0, %s47
      %s71 = sphi 0, %s73
      %s74 = sphi 0, %s71
      %s75 = sphi 0, %s74
      %s91 = sphi 0, %s75
      %s97 = sphi 0, %s99
      %s100 = sphi 0, %s97
      %s101 = sphi 0, %s100
      %s117 = sphi 0, %s101
      %s123 = sphi 0, %s125
      %s126 = sphi 0, %s123
      %s127 = sphi 0, %s126
      %s143 = sphi 0, %s127
      %s151 = sphi 0, %s153
      %s154 = sphi 0, %s151
      %s155 = sphi 0, %s154
      %s171 = sphi 0, %s155
    $region4: #{tpu_custom_call.1} parent=1 // loop_header_branch
      %22 = sbr.rel (%p20) target = $region8
    $region5: #{tpu_custom_call.1} parent=1 // loop_body
      %s24 = ssub.s32 %s19, 1
      %s25 = ssub.s32 %s19, 2
      %s32 = sadd.s32 1, %s27
      %p33 = scmp.ge.s32.totalorder %s32, 1
      %s34 = scalar_select %p33, 0, %s32
      %s35 = sadd.s32 1, %s26
      %s36 = scalar_select %p33, %s35, %s26
      %p37 = scmp.ge.s32.totalorder %s36, 2
      %s38 = scalar_select %p37, 0, %s36
      %s39 = ssub.s32 %s26, %s38
      %s40 = ssub.s32 %s27, %s34
      %s41 = sor.u32 %s39, %s40
      %p42 = scmp.eq.s32.totalorder %s41, 0
      %s44 = sadd.s32 %s43, 1
      %s45 = scalar_select %p42, %s43, %s44
      %p48 = pneg %p42
      %p49 = scmp.eq.s32.totalorder %s19, 1
      %p50 = por %p48, %p49
      %p51 = scmp.ne.s32.totalorder %s43, %s46
      %p52 = scmp.eq.s32.totalorder %s19, 0
      %p53 = por %p51, %p52
      %p54 = scmp.ne.s32.totalorder %s43, %s46
      %p55 = scmp.eq.s32.totalorder %s24, 1
      %p56 = por %p54, %p55
      %p57 = scmp.ne.s32.totalorder %s46, %s47
      %p58 = scmp.eq.s32.totalorder %s24, 0
      %p59 = por %p57, %p58
      %p60 = scmp.ne.s32.totalorder %s46, %s47
      %p61 = scmp.eq.s32.totalorder %s25, 1
      %p62 = por %p60, %p61
      %p64 = scmp.ne.s32.totalorder %s47, %s63
      %p65 = scmp.eq.s32.totalorder %s25, 0
      %p66 = por %p64, %p65
      %s67 = ssub.s32 %s26, %s38
      %s68 = ssub.s32 %s27, %s34
      %s69 = sor.u32 %s67, %s68
      %p70 = scmp.eq.s32.totalorder %s69, 0
      %s72 = sadd.s32 %s71, 1
      %s73 = scalar_select %p70, %s71, %s72
      %p76 = pneg %p70
      %p77 = scmp.eq.s32.totalorder %s19, 1
      %p78 = por %p76, %p77
      %p79 = scmp.ne.s32.totalorder %s71, %s74
      %p80 = scmp.eq.s32.totalorder %s19, 0
      %p81 = por %p79, %p80
      %p82 = scmp.ne.s32.totalorder %s71, %s74
      %p83 = scmp.eq.s32.totalorder %s24, 1
      %p84 = por %p82, %p83
      %p85 = scmp.ne.s32.totalorder %s74, %s75
      %p86 = scmp.eq.s32.totalorder %s24, 0
      %p87 = por %p85, %p86
      %p88 = scmp.ne.s32.totalorder %s74, %s75
      %p89 = scmp.eq.s32.totalorder %s25, 1
      %p90 = por %p88, %p89
      %p92 = scmp.ne.s32.totalorder %s75, %s91
      %p93 = scmp.eq.s32.totalorder %s25, 0
      %p94 = por %p92, %p93
      %s95 = ssub.s32 %s27, %s34
      %p96 = scmp.eq.s32.totalorder %s95, 0
      %s98 = sadd.s32 %s97, 1
      %s99 = scalar_select %p96, %s97, %s98
      %p102 = pneg %p96
      %p103 = scmp.eq.s32.totalorder %s19, 1
      %p104 = por %p102, %p103
      %p105 = scmp.ne.s32.totalorder %s97, %s100
      %p106 = scmp.eq.s32.totalorder %s19, 0
      %p107 = por %p105, %p106
      %p108 = scmp.ne.s32.totalorder %s97, %s100
      %p109 = scmp.eq.s32.totalorder %s24, 1
      %p110 = por %p108, %p109
      %p111 = scmp.ne.s32.totalorder %s100, %s101
      %p112 = scmp.eq.s32.totalorder %s24, 0
      %p113 = por %p111, %p112
      %p114 = scmp.ne.s32.totalorder %s100, %s101
      %p115 = scmp.eq.s32.totalorder %s25, 1
      %p116 = por %p114, %p115
      %p118 = scmp.ne.s32.totalorder %s101, %s117
      %p119 = scmp.eq.s32.totalorder %s25, 0
      %p120 = por %p118, %p119
      %s121 = ssub.s32 %s27, %s34
      %p122 = scmp.eq.s32.totalorder %s121, 0
      %s124 = sadd.s32 %s123, 1
      %s125 = scalar_select %p122, %s123, %s124
      %p128 = pneg %p122
      %p129 = scmp.eq.s32.totalorder %s19, 1
      %p130 = por %p128, %p129
      %p131 = scmp.ne.s32.totalorder %s123, %s126
      %p132 = scmp.eq.s32.totalorder %s19, 0
      %p133 = por %p131, %p132
      %p134 = scmp.ne.s32.totalorder %s123, %s126
      %p135 = scmp.eq.s32.totalorder %s24, 1
      %p136 = por %p134, %p135
      %p137 = scmp.ne.s32.totalorder %s126, %s127
      %p138 = scmp.eq.s32.totalorder %s24, 0
      %p139 = por %p137, %p138
      %p140 = scmp.ne.s32.totalorder %s126, %s127
      %p141 = scmp.eq.s32.totalorder %s25, 1
      %p142 = por %p140, %p141
      %p144 = scmp.ne.s32.totalorder %s127, %s143
      %p145 = scmp.eq.s32.totalorder %s25, 0
      %p146 = por %p144, %p145
      %s147 = ssub.s32 %s26, %s38
      %s148 = ssub.s32 %s27, %s34
      %s149 = sor.u32 %s147, %s148
      %p150 = scmp.eq.s32.totalorder %s149, 0
      %s152 = sadd.s32 %s151, 1
      %s153 = scalar_select %p150, %s151, %s152
      %p156 = pneg %p150
      %p157 = scmp.eq.s32.totalorder %s19, 1
      %p158 = por %p156, %p157
      %p159 = scmp.ne.s32.totalorder %s151, %s154
      %p160 = scmp.eq.s32.totalorder %s19, 0
      %p161 = por %p159, %p160
      %p162 = scmp.ne.s32.totalorder %s151, %s154
      %p163 = scmp.eq.s32.totalorder %s24, 1
      %p164 = por %p162, %p163
      %p165 = scmp.ne.s32.totalorder %s154, %s155
      %p166 = scmp.eq.s32.totalorder %s24, 0
      %p167 = por %p165, %p166
      %p168 = scmp.ne.s32.totalorder %s154, %s155
      %p169 = scmp.eq.s32.totalorder %s25, 1
      %p170 = por %p168, %p169
      %p172 = scmp.ne.s32.totalorder %s155, %s171
      %p173 = scmp.eq.s32.totalorder %s25, 0
      %p174 = por %p172, %p173
      %p175 = scmp.le.s32.totalorder 1, %s19
      %p176 = scmp.lt.s32.totalorder %s19, 3
      %p177 = pnand %p175, %p176
      %p178 = pneg %p177
      // Predicated region
      $region9: #{tpu_custom_call.1} parent=5 // pred_check
        _
      $region10: #{tpu_custom_call.1} parent=5 // pred_check_branch
        %180 = sbr.rel (%p177) target = $region12
      $region11: #{tpu_custom_call.1} parent=5 // pred_region
        %s181 = ssub.s32 %s19, 1
        // Predicated region
        $region13: #{tpu_custom_call.1} parent=11 // pred_check
          %p182 = pneg %p113
        $region14: #{tpu_custom_call.1} parent=11 // pred_check_branch
          %184 = sbr.rel (%p182) target = $region16
        $region15: #{tpu_custom_call.1} parent=11 // pred_region
          %p185 = scmp.lt.s32.totalorder %s29, 0
          %s186 = scalar_select %p185, %s29, 0
          %s187 = scalar_lea.vmem %s2, %s186
        $region16: #{tpu_custom_call.1} parent=11 // pred_fallthru
          _
        // Predicated region
        $region17: #{tpu_custom_call.1} parent=11 // pred_check
          %p188 = pneg %p139
        $region18: #{tpu_custom_call.1} parent=11 // pred_check_branch
          %190 = sbr.rel (%p188) target = $region20
        $region19: #{tpu_custom_call.1} parent=11 // pred_region
          %p191 = scmp.lt.s32.totalorder %s29, 0
          %s192 = scalar_select %p191, %s29, 0
          %s193 = scalar_lea.vmem %s3, %s192
        $region20: #{tpu_custom_call.1} parent=11 // pred_fallthru
          _
      $region12: #{tpu_custom_call.1} parent=5 // pred_fallthru
        _
      %p194 = scmp.lt.s32.totalorder %s19, 2
      // Predicated region
      $region21: #{tpu_custom_call.1} parent=5 // pred_check
        %p195 = pneg %p194
      $region22: #{tpu_custom_call.1} parent=5 // pred_check_branch
        %197 = sbr.rel (%p195) target = $region24
      $region23: #{tpu_custom_call.1} parent=5 // pred_region
        // Predicated region
        $region25: #{tpu_custom_call.1} parent=23 // pred_check
          %p198 = pneg %p53
        $region26: #{tpu_custom_call.1} parent=23 // pred_check_branch
          %200 = sbr.rel (%p198) target = $region28
        $region27: #{tpu_custom_call.1} parent=23 // pred_region
          %s201 = sand.u32 %s43, 1
          %s202 = scalar_lea.sflag [#allocation3], %s201
          %s203 = sand.u32 %s43, 1
          %s204 = smul.addr %s203, 8
          %s205 = scalar_lea.vmem [#allocation2], %s204
          %s207 = ssub.s32 128, 128
          %208 = vsyncadd %s202, %s207
          %s209 = sadd.s32 %s27, %s26
          %s210 = smul.addr %s209, 128
          %s211 = scalar_lea.hbm %s0, %s210
          %s213 = sshll.u32 %s205, 4
          %s214 = int_to_ptr.vmem [resolvable:$true] %s213
          %216 = dma.hbm_to_vmem [thread:$0]  %s211, 128, %s214, %s202
        $region28: #{tpu_custom_call.1} parent=23 // pred_fallthru
          _
        // Predicated region
        $region29: #{tpu_custom_call.1} parent=23 // pred_check
          %p217 = pneg %p81
        $region30: #{tpu_custom_call.1} parent=23 // pred_check_branch
          %219 = sbr.rel (%p217) target = $region32
        $region31: #{tpu_custom_call.1} parent=23 // pred_region
          %s220 = sand.u32 %s71, 1
          %s221 = scalar_lea.sflag [#allocation6], %s220
          %s222 = sand.u32 %s71, 1
          %s223 = smul.addr %s222, 8
          %s224 = scalar_lea.vmem [#allocation5], %s223
          %s226 = ssub.s32 128, 128
          %227 = vsyncadd %s221, %s226
          %s228 = sadd.s32 %s27, %s26
          %s229 = smul.addr %s228, 128
          %s230 = scalar_lea.hbm %s1, %s229
          %s232 = sshll.u32 %s224, 4
          %s233 = int_to_ptr.vmem [resolvable:$true] %s232
          %235 = dma.hbm_to_vmem [thread:$0]  %s230, 128, %s233, %s221
        $region32: #{tpu_custom_call.1} parent=23 // pred_fallthru
          _
      $region24: #{tpu_custom_call.1} parent=5 // pred_fallthru
        _
      %p236 = scmp.le.s32.totalorder 1, %s19
      %p237 = scmp.lt.s32.totalorder %s19, 3
      %p238 = pnand %p236, %p237
      %p239 = pneg %p238
      // Predicated region
      $region33: #{tpu_custom_call.1} parent=5 // pred_check
        _
      $region34: #{tpu_custom_call.1} parent=5 // pred_check_branch
        %241 = sbr.rel (%p238) target = $region36
      $region35: #{tpu_custom_call.1} parent=5 // pred_region
        %s242 = ssub.s32 %s19, 1
        %s243 = sand.u32 %s46, 1
        %s244 = scalar_lea.sflag [#allocation3], %s243
        %s245 = sand.u32 %s46, 1
        %s246 = smul.addr %s245, 8
        %s247 = scalar_lea.vmem [#allocation2], %s246
        // Predicated region
        $region37: #{tpu_custom_call.1} parent=35 // pred_check
          %p248 = pneg %p59
        $region38: #{tpu_custom_call.1} parent=35 // pred_check_branch
          %250 = sbr.rel (%p248) target = $region40
        $region39: #{tpu_custom_call.1} parent=35 // pred_region
          %251 = dma.done %s244, 128
        $region40: #{tpu_custom_call.1} parent=35 // pred_fallthru
          _
        %s252 = sand.u32 %s74, 1
        %s253 = scalar_lea.sflag [#allocation6], %s252
        %s254 = sand.u32 %s74, 1
        %s255 = smul.addr %s254, 8
        %s256 = scalar_lea.vmem [#allocation5], %s255
        // Predicated region
        $region41: #{tpu_custom_call.1} parent=35 // pred_check
          %p257 = pneg %p87
        $region42: #{tpu_custom_call.1} parent=35 // pred_check_branch
          %259 = sbr.rel (%p257) target = $region44
        $region43: #{tpu_custom_call.1} parent=35 // pred_region
          %260 = dma.done %s253, 128
        $region44: #{tpu_custom_call.1} parent=35 // pred_fallthru
          _
        %s261 = sand.u32 %s46, 1
        %s262 = scalar_lea.sflag [#allocation3], %s261
        %s263 = sand.u32 %s46, 1
        %s264 = smul.addr %s263, 8
        %s265 = scalar_lea.vmem [#allocation2], %s264
        %p266 = pneg %p59
        %p267 = pneg %p56
        %s268 = sand.u32 %s74, 1
        %s269 = scalar_lea.sflag [#allocation6], %s268
        %s270 = sand.u32 %s74, 1
        %s271 = smul.addr %s270, 8
        %s272 = scalar_lea.vmem [#allocation5], %s271
        %p273 = pneg %p87
        %p274 = pneg %p84
        %p275 = scmp.lt.s32.totalorder %s29, 0
        %s276 = scalar_select %p275, %s29, 0
        %s277 = scalar_lea.vmem %s2, %s276
        %p278 = pneg %p113
        %p279 = pneg %p110
        %p280 = scmp.lt.s32.totalorder %s29, 0
        %s281 = scalar_select %p280, %s29, 0
        %s282 = scalar_lea.vmem %s3, %s281
        %p283 = pneg %p139
        %p284 = pneg %p136
        %p285 = pneg %p167
        %p286 = pneg %p164
        %s287 = sand.u32 %s154, 1
        %s288 = scalar_lea.sflag [#allocation4], %s287
        %s289 = sand.u32 %s154, 1
        %s290 = smul.addr %s289, 8
        %s291 = scalar_lea.vmem [#allocation7], %s290
        %p292 = scmp.lt.s32.totalorder %s29, 0
        %s293 = scalar_select %p292, %s29, 0
        %s294 = scalar_lea.vmem %s2, %s293
        %p295 = scmp.lt.s32.totalorder %s29, 0
        %s296 = scalar_select %p295, %s29, 0
        %s297 = scalar_lea.vmem %s3, %s296
        %v298 = vld [vmem:[%s247] sm:$0xff]
        %v299 = vld [vmem:[%s256] sm:$0xff]
        %v300 = vadd.f32 %v298, %v299
        %v301 = vlaneseq
        %v302 = vshrl.u32 %v301, 7
        %v303 = vsub.s32 0, %v302
        %v304 = vrot.slane %v300, %v303
        %v305 = vsub.f32 %v300, %v304
        %vm306 = vcmask 261120
        %v307 = vsel %vm306, %v305, 0.0
        %v308 = vrot.slane %v307, 4
        %v309 = vadd.f32 %v307, %v308
        %v310 = vrot.slane %v309, 2
        %v311 = vadd.f32 %v309, %v310
        %v312 = vrot.slane %v311, 1
        %v313 = vadd.f32 %v311, %v312
        %v314 = vmul.f32 %v313, 0.125
        %v315 = vmul.f32 %v305, %v305
        %v316 = vsel %vm306, %v315, 0.0
        %v317 = vrot.slane %v316, 4
        %v318 = vadd.f32 %v316, %v317
        %v319 = vrot.slane %v318, 2
        %v320 = vadd.f32 %v318, %v319
        %v321 = vrot.slane %v320, 1
        %v322 = vadd.f32 %v320, %v321
        %v323 = vmul.f32 %v322, 0.125
        %v324 = vmul.f32 %v314, %v314
        %v325 = vsub.f32 %v323, %v324
        %v326 = vadd.f32 %v314, %v300
        %v327 = vmax.f32 %v325, 0.0
        %v328 = vadd.f32 %v327, 1e-05
        %v329 = vrsqrt.pop %v328
        %v330 = vld [vmem:[%s294] sm:$0x1]
        %v331 = vmul.f32 %v329, %v330
        %v332 = vld [vmem:[%s297] sm:$0x1]
        %v333 = vmul.f32 %v326, %v331
        %v334 = vsub.f32 %v332, %v333
        %v335 = vlaneseq
        %v336 = vshrl.u32 %v335, 7
        %v337 = vsub.s32 0, %v336
        %v338 = vrot.slane %v331, %v337
        %v339 = vmul.f32 %v300, %v338
        %v341 = vlaneseq
        %v342 = vshrl.u32 %v341, 7
        %v343 = vsub.s32 0, %v342
        %v344 = vrot.slane %v334, %v343
        %v346 = vadd.f32 %v339, %v344
        %347 = vst.msk [vmem:[%s291] sm:$0xff] %vm306, %v346
        %s348 = sand.u32 %s154, 1
        %s349 = scalar_lea.sflag [#allocation4], %s348
        %s350 = sand.u32 %s154, 1
        %s351 = smul.addr %s350, 8
        %s352 = scalar_lea.vmem [#allocation7], %s351
        // Predicated region
        $region45: #{tpu_custom_call.1} parent=35 // pred_check
          %p353 = pneg %p164
        $region46: #{tpu_custom_call.1} parent=35 // pred_check_branch
          %355 = sbr.rel (%p353) target = $region48
        $region47: #{tpu_custom_call.1} parent=35 // pred_region
          %s357 = ssub.s32 128, 128
          %358 = vsyncadd %s349, %s357
          %s359 = sadd.s32 %s29, %s28
          %s360 = smul.addr %s359, 128
          %s361 = scalar_lea.hbm %s4, %s360
          %s363 = sshll.u32 %s352, 4
          %s364 = int_to_ptr.vmem [resolvable:$true] %s363
          %366 = dma.vmem_to_hbm [thread:$0]  %s364, 128, %s361, %s349
        $region48: #{tpu_custom_call.1} parent=35 // pred_fallthru
          _
      $region36: #{tpu_custom_call.1} parent=5 // pred_fallthru
        _
      %p367 = scmp.le.s32.totalorder 2, %s19
      // Predicated region
      $region49: #{tpu_custom_call.1} parent=5 // pred_check
        %p368 = pneg %p367
      $region50: #{tpu_custom_call.1} parent=5 // pred_check_branch
        %370 = sbr.rel (%p368) target = $region52
      $region51: #{tpu_custom_call.1} parent=5 // pred_region
        %s371 = ssub.s32 %s19, 2
        // Predicated region
        $region53: #{tpu_custom_call.1} parent=51 // pred_check
          %p372 = pneg %p170
        $region54: #{tpu_custom_call.1} parent=51 // pred_check_branch
          %374 = sbr.rel (%p372) target = $region56
        $region55: #{tpu_custom_call.1} parent=51 // pred_region
          %s375 = sand.u32 %s155, 1
          %s376 = scalar_lea.sflag [#allocation4], %s375
          %s377 = sand.u32 %s155, 1
          %s378 = smul.addr %s377, 8
          %s379 = scalar_lea.vmem [#allocation7], %s378
          %380 = dma.done %s376, 128
        $region56: #{tpu_custom_call.1} parent=51 // pred_fallthru
          _
      $region52: #{tpu_custom_call.1} parent=5 // pred_fallthru
        _
    $region6: #{tpu_custom_call.1} parent=1 // loop_footer
      %s23 = sadd.s32 1, %s19
    $region7: #{tpu_custom_call.1} parent=1 // loop_footer_branch
      %18 = sbr.rel target = $region3
    $region8: #{tpu_custom_call.1} parent=1 // loop_exit
      _
    %381 = vsyncpa [#allocation3], 1
    %s382 = scalar_lea.sflag [#allocation3], 1
    %383 = vsyncpa %s382, 1
    %384 = vsyncpa [#allocation6], 1
    %s385 = scalar_lea.sflag [#allocation6], 1
    %386 = vsyncpa %s385, 1
    %387 = vsyncpa [#allocation4], 1
    %s388 = scalar_lea.sflag [#allocation4], 1
    %389 = vsyncpa %s388, 1

</llo_original>
